<compile_context>
chip_gen: v6e
topology: v6e:2x2x1
jax: 0.10.0
libtpu: 0.0.40
codegen_flags: <defaults>
</compile_context>

<pallas_src>
import functools

import jax
import jax.numpy as jnp
from jax import lax
from jax.experimental import pallas as pl
from jax.experimental.pallas import tpu as pltpu


def _auc_loss_kernel(pc_ref, tc_ref, pr_ref, hn_ref, out_ref, acc_ref, *,
                     lane_chunk, no_ties):
    # pc_ref : (TM, 1)     column tile of scores   (the "i" / positive axis)
    # tc_ref : (TM, 1)     column tile of labels   (applied only at finalize)
    # pr_ref : (1, TN)     lane tile of scores     (the "j" / negative axis)
    # hn_ref : (1, TN)     lane tile of 0.5*(1 - t_j)   (exactly 0 on padding)
    # out_ref: (1, 8, 128) per-row-tile partial numerator (scalar broadcast)
    # acc_ref: (TM, 128)   lane-dense f32 accumulator, carried across j axis
    j = pl.program_id(1)

    @pl.when(j == 0)
    def _init():
        acc_ref[...] = jnp.zeros_like(acc_ref)

    pc = pc_ref[...]                     # (TM, 1); stays lane-replicated
    tile_n = pr_ref.shape[1]
    cols = lane_chunk // 128             # 128-lane columns per inner chunk
    num_chunks = tile_n // lane_chunk

    def chunk_body(c, carry):
        # Sweep `lane_chunk` lanes.  Each 128-lane column yields a (TM, 128)
        # contribution that is folded immediately, so live temporaries stay at
        # a few vreg-slabs instead of a multi-MiB (TM, TN) block.
        partial = None
        for k in range(cols):
            start = pl.multiple_of(c * lane_chunk + k * 128, 128)
            pr_c = pr_ref[:, pl.ds(start, 128)]    # (1, 128)
            hn_c = hn_ref[:, pl.ds(start, 128)]    # (1, 128) = 0.5*(1 - t_j)
            neg_c = hn_c + hn_c                    # (1, 128) =        1 - t_j
            if no_ties:
                # Opt-in fast path (2 VALU ops/pair); valid only w/o score ties.
                contrib = jnp.where(pc > pr_c, neg_c, 0.0)
            else:
                # pair(i,j)*(1-t_j):  >  -> (1-t_j);  == -> 0.5*(1-t_j);  < -> 0
                contrib = jnp.where(pc > pr_c, neg_c,
                                    jnp.where(pc == pr_c, hn_c, 0.0))
            partial = contrib if partial is None else partial + contrib
        # One lane-dense RMW of the accumulator per chunk (plain VPU adds; no
        # per-step cross-lane reduce, no (TM,1) layout wasting 127/128 lanes).
        acc_ref[...] += partial
        return carry

    lax.fori_loop(0, num_chunks, chunk_body, 0)

    # NOTE: the weighted reduce could also be pushed onto the idle MXU
    # (acc += dot(indicator, (1 - t_j) column)); kept on the VPU here because
    # the fold adds are already a small fraction of the cmp/select work and the
    # exact-f32 path avoids bf16 pack traffic / tiny-N matmul lowering risk.
    @pl.when(j == pl.num_programs(1) - 1)
    def _finalize():
        # Cross-lane (XLU) reduce + t_i weighting happen once per row tile.
        row_sums = jnp.sum(acc_ref[...], axis=1, keepdims=True)   # (TM, 1)
        total = jnp.sum(row_sums * tc_ref[...])                   # scalar
        out_ref[...] = jnp.full(out_ref.shape, total, dtype=out_ref.dtype)


def _round_up(x, m):
    return ((x + m - 1) // m) * m


def auc_loss(y_pred, y_true, *, tile_m=256, tile_n=16384, lane_chunk=512,
             assume_no_ties=False):
    """1 - roc_auc_score(y_true, y_pred) for binary labels, via Pallas on TPU."""
    y_pred = jnp.asarray(y_pred).reshape(-1).astype(jnp.float32)
    y_true = jnp.asarray(y_true).reshape(-1).astype(jnp.float32)
    n = y_pred.shape[0]

    # ---- tiling (all static Python ints) -----------------------------------
    # Lane axis: chunk a multiple of 128; tile_n a multiple of the chunk.
    lane_chunk = max(128, (lane_chunk // 128) * 128)
    tile_n = max(lane_chunk, (tile_n // lane_chunk) * lane_chunk)
    tile_n = min(tile_n, _round_up(n, lane_chunk))
    n_n = _round_up(n, tile_n)

    # Row axis: multiple of 8 sublanes.
    tile_m = max(8, (tile_m // 8) * 8)
    tile_m = min(tile_m, _round_up(n, 8))
    n_m = _round_up(n, tile_m)
    # v7x megacore: the "parallel" row axis is sharded across 2 TensorCores, so
    # keep grid[0] >= 2 (and even) whenever the padded batch has >= 16 rows.
    if n_m // tile_m == 1 and n_m >= 16:
        n_m = _round_up(n, 16)
        tile_m = n_m // 2

    grid = (n_m // tile_m, n_n // tile_n)

    # Exact zero-weight padding: padded rows carry t_i = 0 (no positive weight)
    # and padded lanes carry 0.5*(1 - t_j) = 0 (no negative weight).
    pred_col = jnp.pad(y_pred, (0, n_m - n)).reshape(n_m, 1)
    true_col = jnp.pad(y_true, (0, n_m - n)).reshape(n_m, 1)
    pred_row = jnp.pad(y_pred, (0, n_n - n)).reshape(1, n_n)
    half_neg = jnp.pad(0.5 * (1.0 - y_true), (0, n_n - n)).reshape(1, n_n)

    kernel = functools.partial(_auc_loss_kernel, lane_chunk=lane_chunk,
                               no_ties=assume_no_ties)

    partials = pl.pallas_call(
        kernel,
        out_shape=jax.ShapeDtypeStruct((grid[0], 8, 128), jnp.float32),
        grid_spec=pltpu.PrefetchScalarGridSpec(
            num_scalar_prefetch=0,
            grid=grid,
            in_specs=[
                pl.BlockSpec((tile_m, 1), lambda i, j: (i, 0)),   # scores (col)
                pl.BlockSpec((tile_m, 1), lambda i, j: (i, 0)),   # labels (col)
                pl.BlockSpec((1, tile_n), lambda i, j: (0, j)),   # scores (row)
                pl.BlockSpec((1, tile_n), lambda i, j: (0, j)),   # 0.5*(1-labels)
            ],
            out_specs=pl.BlockSpec((1, 8, 128), lambda i, j: (i, 0, 0)),
            scratch_shapes=[pltpu.VMEM((tile_m, 128), jnp.float32)],
        ),
        compiler_params=pltpu.CompilerParams(
            # Row-tile axis holds independent partial sums -> megacore-parallel
            # on v7x; lane axis carries the accumulator -> arbitrary.
            dimension_semantics=("parallel", "arbitrary"),
            # Per-step VMEM is tiny now (chunked compute, no (TM,TN) temps);
            # explicit limit just keeps headroom above v5e's 16 MiB default.
            vmem_limit_bytes=32 * 1024 * 1024,
        ),
    )(pred_col, true_col, pred_row, half_neg)

    # Finalize in the JAX wrapper: sum of per-row-tile partials, then 1 - AUC.
    numerator = jnp.sum(partials[:, 0, 0])
    n_pos = jnp.sum(y_true)
    n_neg = jnp.float32(n) - n_pos
    # TODO(synk): NaN if a class is absent in the batch (sklearn's error path).
    auc = numerator / (n_pos * n_neg)
    return (1.0 - auc).astype(jnp.float32)


def _auc_loss_ref(y_pred, y_true):
    """Pure-JAX reference (same pairwise Mann-Whitney formula)."""
    p = y_pred.astype(jnp.float32)
    t = y_true.astype(jnp.float32)
    pair = (p[:, None] > p[None, :]).astype(jnp.float32) + 0.5 * (
        p[:, None] == p[None, :]
    ).astype(jnp.float32)
    w = t[:, None] * (1.0 - t[None, :])
    n_pos = jnp.sum(t)
    n_neg = t.shape[0] - n_pos
    auc = jnp.sum(pair * w) / (n_pos * n_neg)
    return 1.0 - auc


if __name__ == "__main__":
    key = jax.random.PRNGKey(0)
    k_pred, k_perm = jax.random.split(key)

    N = 1000  # deliberately ragged batch to exercise the zero-weight padding
    y_pred = jax.random.uniform(k_pred, (N,), dtype=jnp.float32)
    labels = jnp.concatenate([jnp.ones((N // 2,)), jnp.zeros((N - N // 2,))])
    y_true = jax.random.permutation(k_perm, labels).astype(jnp.float32)

    ref = jax.block_until_ready(_auc_loss_ref(y_pred, y_true))

    # Small explicit tiles -> exercises both grid axes and the multi-chunk /
    # multi-column inner loop (8 row tiles x 2 lane tiles, 2 chunks x 2 cols).
    loss_small = jax.block_until_ready(
        auc_loss(y_pred, y_true, tile_m=128, tile_n=512, lane_chunk=256))
    assert jnp.allclose(loss_small, ref, atol=1e-5), (loss_small, ref)

    # Default (performance) tiling path.
    loss_default = jax.block_until_ready(auc_loss(y_pred, y_true))
    assert jnp.allclose(loss_default, ref, atol=1e-5), (loss_default, ref)

    # Opt-in no-ties fast path (uniform random scores have no ties).
    loss_nt = jax.block_until_ready(auc_loss(y_pred, y_true, assume_no_ties=True))
    assert jnp.allclose(loss_nt, ref, atol=1e-5), (loss_nt, ref)

    # Tie handling sanity check: heavily quantized scores produce many ties.
    y_pred_q = jnp.round(y_pred * 8.0) / 8.0
    ref_q = jax.block_until_ready(_auc_loss_ref(y_pred_q, y_true))
    loss_q = jax.block_until_ready(auc_loss(y_pred_q, y_true))
    assert jnp.allclose(loss_q, ref_q, atol=1e-5), (loss_q, ref_q)

    print("KERNEL_OK")
</pallas_src>

<mosaic_0001>
module attributes {stable_mosaic.version = 11 : i64} {
  func.func @_auc_loss_kernel(%arg0: i32, %arg1: i32, %arg2: memref<128x1xf32, #tpu.memory_space<vmem>>, %arg3: memref<128x1xf32, #tpu.memory_space<vmem>>, %arg4: memref<1x512xf32, #tpu.memory_space<vmem>>, %arg5: memref<1x512xf32, #tpu.memory_space<vmem>>, %arg6: memref<1x8x128xf32, #tpu.memory_space<vmem>>, %arg7: memref<128x128xf32, #tpu.memory_space<vmem>>) attributes {dimension_semantics = [#tpu.dimension_semantics<parallel>, #tpu.dimension_semantics<arbitrary>], iteration_bounds = array<i64: 8, 2>, scalar_prefetch = 0 : i64, scratch_operands = 1 : i64, tpu.core_type = #tpu.core_type<tc>, window_params = [{transform_indices = @transform_0, window_bounds = array<i64: 128, 1>}, {transform_indices = @transform_1, window_bounds = array<i64: 128, 1>}, {transform_indices = @transform_2, window_bounds = array<i64: 1, 512>}, {transform_indices = @transform_3, window_bounds = array<i64: 1, 512>}, {transform_indices = @transform_4, window_bounds = array<i64: 1, 8, 128>}]} {
    %c0_i32 = arith.constant 0 : i32
    %0 = arith.cmpi eq, %arg1, %c0_i32 : i32
    %1 = arith.extui %0 : i1 to i32
    %c0_i32_0 = arith.constant 0 : i32
    %2 = arith.cmpi ne, %1, %c0_i32_0 : i32
    scf.if %2 {
      %cst = arith.constant 0.000000e+00 : f32
      %8 = vector.broadcast %cst : f32 to vector<128x128xf32>
      %c0_6 = arith.constant 0 : index
      %c0_7 = arith.constant 0 : index
      %9 = vector.load %arg7[%c0_6, %c0_7] : memref<128x128xf32, #tpu.memory_space<vmem>>, vector<128x128xf32>
      tpu.vector_store %arg7[%c0_6, %c0_7], %8 {strides = array<i32>} : memref<128x128xf32, #tpu.memory_space<vmem>>, vector<128x128xf32>,
    } else {
    }
    %c0 = arith.constant 0 : index
    %c0_1 = arith.constant 0 : index
    %3 = vector.load %arg2[%c0, %c0_1] : memref<128x1xf32, #tpu.memory_space<vmem>>, vector<128x1xf32>
    %c0_i32_2 = arith.constant 0 : i32
    %c2_i32 = arith.constant 2 : i32
    %4 = arith.addi %c0_i32_2, %c2_i32 : i32
    %c1_i32 = arith.constant 1 : i32
    scf.for %arg8 = %c0_i32_2 to %4 step %c1_i32  : i32 {
      %c256_i32 = arith.constant 256 : i32
      %8 = arith.muli %arg8, %c256_i32 : i32
      %c0_i32_6 = arith.constant 0 : i32
      %9 = arith.addi %8, %c0_i32_6 : i32
      %10 = tpu.assume_multiple %9, 128 : i32
      %c0_7 = arith.constant 0 : index
      %11 = arith.index_cast %10 : i32 to index
      %12 = vector.load %arg4[%c0_7, %11] : memref<1x512xf32, #tpu.memory_space<vmem>>, vector<1x128xf32>
      %c0_8 = arith.constant 0 : index
      %13 = arith.index_cast %10 : i32 to index
      %14 = vector.load %arg5[%c0_8, %13] : memref<1x512xf32, #tpu.memory_space<vmem>>, vector<1x128xf32>
      %15 = arith.addf %14, %14 : vector<1x128xf32>
      %16 = vector.broadcast %3 : vector<128x1xf32> to vector<128x128xf32>
      %17 = vector.broadcast %12 : vector<1x128xf32> to vector<128x128xf32>
      %18 = arith.cmpf ogt, %16, %17 : vector<128x128xf32>
      %19 = vector.broadcast %3 : vector<128x1xf32> to vector<128x128xf32>
      %20 = vector.broadcast %12 : vector<1x128xf32> to vector<128x128xf32>
      %21 = arith.cmpf oeq, %19, %20 : vector<128x128xf32>
      %cst = arith.constant 0.000000e+00 : f32
      %22 = vector.shape_cast %14 : vector<1x128xf32> to vector<1x128xf32>
      %23 = vector.broadcast %22 : vector<1x128xf32> to vector<128x128xf32>
      %24 = vector.broadcast %cst : f32 to vector<128x128xf32>
      %25 = arith.select %21, %23, %24 : vector<128x128xi1>, vector<128x128xf32>
      %26 = vector.shape_cast %15 : vector<1x128xf32> to vector<1x128xf32>
      %27 = vector.broadcast %26 : vector<1x128xf32> to vector<128x128xf32>
      %28 = arith.select %18, %27, %25 : vector<128x128xi1>, vector<128x128xf32>
      %c256_i32_9 = arith.constant 256 : i32
      %29 = arith.muli %arg8, %c256_i32_9 : i32
      %c128_i32 = arith.constant 128 : i32
      %30 = arith.addi %29, %c128_i32 : i32
      %31 = tpu.assume_multiple %30, 128 : i32
      %c0_10 = arith.constant 0 : index
      %32 = arith.index_cast %31 : i32 to index
      %33 = vector.load %arg4[%c0_10, %32] : memref<1x512xf32, #tpu.memory_space<vmem>>, vector<1x128xf32>
      %c0_11 = arith.constant 0 : index
      %34 = arith.index_cast %31 : i32 to index
      %35 = vector.load %arg5[%c0_11, %34] : memref<1x512xf32, #tpu.memory_space<vmem>>, vector<1x128xf32>
      %36 = arith.addf %35, %35 : vector<1x128xf32>
      %37 = vector.broadcast %3 : vector<128x1xf32> to vector<128x128xf32>
      %38 = vector.broadcast %33 : vector<1x128xf32> to vector<128x128xf32>
      %39 = arith.cmpf ogt, %37, %38 : vector<128x128xf32>
      %40 = vector.broadcast %3 : vector<128x1xf32> to vector<128x128xf32>
      %41 = vector.broadcast %33 : vector<1x128xf32> to vector<128x128xf32>
      %42 = arith.cmpf oeq, %40, %41 : vector<128x128xf32>
      %cst_12 = arith.constant 0.000000e+00 : f32
      %43 = vector.shape_cast %35 : vector<1x128xf32> to vector<1x128xf32>
      %44 = vector.broadcast %43 : vector<1x128xf32> to vector<128x128xf32>
      %45 = vector.broadcast %cst_12 : f32 to vector<128x128xf32>
      %46 = arith.select %42, %44, %45 : vector<128x128xi1>, vector<128x128xf32>
      %47 = vector.shape_cast %36 : vector<1x128xf32> to vector<1x128xf32>
      %48 = vector.broadcast %47 : vector<1x128xf32> to vector<128x128xf32>
      %49 = arith.select %39, %48, %46 : vector<128x128xi1>, vector<128x128xf32>
      %50 = arith.addf %28, %49 : vector<128x128xf32>
      %c0_13 = arith.constant 0 : index
      %c0_14 = arith.constant 0 : index
      %51 = vector.load %arg7[%c0_13, %c0_14] : memref<128x128xf32, #tpu.memory_space<vmem>>, vector<128x128xf32>
      %52 = arith.addf %51, %50 : vector<128x128xf32>
      %c0_15 = arith.constant 0 : index
      %c0_16 = arith.constant 0 : index
      %53 = vector.load %arg7[%c0_15, %c0_16] : memref<128x128xf32, #tpu.memory_space<vmem>>, vector<128x128xf32>
      tpu.vector_store %arg7[%c0_15, %c0_16], %52 {strides = array<i32>} : memref<128x128xf32, #tpu.memory_space<vmem>>, vector<128x128xf32>,
    }
    %c2_i32_3 = arith.constant 2 : i32
    %c1_i32_4 = arith.constant 1 : i32
    %5 = arith.cmpi eq, %arg1, %c1_i32_4 : i32
    %6 = arith.extui %5 : i1 to i32
    %c0_i32_5 = arith.constant 0 : i32
    %7 = arith.cmpi ne, %6, %c0_i32_5 : i32
    scf.if %7 {
      %c0_6 = arith.constant 0 : index
      %c0_7 = arith.constant 0 : index
      %8 = vector.load %arg7[%c0_6, %c0_7] : memref<128x128xf32, #tpu.memory_space<vmem>>, vector<128x128xf32>
      %cst = arith.constant dense<0.000000e+00> : vector<128xf32>
      %9 = vector.multi_reduction <add>, %8, %cst [1] : vector<128x128xf32> to vector<128xf32>
      %10 = vector.shape_cast %9 : vector<128xf32> to vector<128x1xf32>
      %c0_8 = arith.constant 0 : index
      %c0_9 = arith.constant 0 : index
      %11 = vector.load %arg3[%c0_8, %c0_9] : memref<128x1xf32, #tpu.memory_space<vmem>>, vector<128x1xf32>
      %12 = arith.mulf %10, %11 : vector<128x1xf32>
      %13 = vector.shape_cast %12 : vector<128x1xf32> to vector<1x128x1xf32>
      %cst_10 = arith.constant dense<0.000000e+00> : vector<1xf32>
      %14 = vector.multi_reduction <add>, %13, %cst_10 [1, 2] : vector<1x128x1xf32> to vector<1xf32>
      %15 = vector.shape_cast %14 : vector<1xf32> to vector<1x1x1xf32>
      %16 = vector.extract %15[0, 0, 0] : f32 from vector<1x1x1xf32>
      %17 = vector.broadcast %16 : f32 to vector<1x8x128xf32>
      %c0_11 = arith.constant 0 : index
      %c0_12 = arith.constant 0 : index
      %c0_13 = arith.constant 0 : index
      %18 = vector.load %arg6[%c0_11, %c0_12, %c0_13] : memref<1x8x128xf32, #tpu.memory_space<vmem>>, vector<1x8x128xf32>
      tpu.vector_store %arg6[%c0_11, %c0_12, %c0_13], %17 {strides = array<i32>} : memref<1x8x128xf32, #tpu.memory_space<vmem>>, vector<1x8x128xf32>,
    } else {
    }
    return
  }
  func.func @transform_0(%arg0: i32, %arg1: i32) -> (i32, i32) {
    %c0_i32 = arith.constant 0 : i32
    %c0_i32_0 = arith.constant 0 : i32
    return %arg0, %c0_i32 : i32, i32
  }
  func.func @transform_1(%arg0: i32, %arg1: i32) -> (i32, i32) {
    %c0_i32 = arith.constant 0 : i32
    %c0_i32_0 = arith.constant 0 : i32
    return %arg0, %c0_i32 : i32, i32
  }
  func.func @transform_2(%arg0: i32, %arg1: i32) -> (i32, i32) {
    %c0_i32 = arith.constant 0 : i32
    %c0_i32_0 = arith.constant 0 : i32
    return %c0_i32, %arg1 : i32, i32
  }
  func.func @transform_3(%arg0: i32, %arg1: i32) -> (i32, i32) {
    %c0_i32 = arith.constant 0 : i32
    %c0_i32_0 = arith.constant 0 : i32
    return %c0_i32, %arg1 : i32, i32
  }
  func.func @transform_4(%arg0: i32, %arg1: i32) -> (i32, i32, i32) {
    %c0_i32 = arith.constant 0 : i32
    %c0_i32_0 = arith.constant 0 : i32
    %c0_i32_1 = arith.constant 0 : i32
    return %arg0, %c0_i32, %c0_i32_0 : i32, i32, i32
  }
}

</mosaic_0001>

<llo_original>
// kernel: tpu_custom_call.1
$region0: #{tpu_custom_call.1}
  #allocation0 [shape = 'u32[]', space=smem, size = 0x4, offset = 0x4, fixed_abs, tag = 'smem constant byte address 0x4 - core index']
  #allocation1 [shape = 'u32[144,128]{1,0:T(1,128)}', space=vmem, size = 0x12000, scoped, tag = 'internal scratch']
  #allocation2 [shape = 'f32[128,128]{1,0:T(8,128)}', space=vmem, size = 0x10000, scoped, tag = 'scratch operand']
  %s0 = inlined_call_operand.vmem [shape: f32[1024,1], index: 0, kind: input, shape index: {}]
  %s1 = inlined_call_operand.vmem [shape: f32[1024,1], index: 1, kind: input, shape index: {}]
  %s2 = inlined_call_operand.vmem [shape: f32[1,1024], index: 2, kind: input, shape index: {}]
  %s3 = inlined_call_operand.vmem [shape: f32[1,1024], index: 3, kind: input, shape index: {}]
  %s4 = inlined_call_operand.hbm [shape: f32[8,8,128], index: 4, kind: output, shape index: {}]
  %s5 = sld [smem:[#allocation0]]
  $region64: #{tpu_custom_call.1} parent=0
    _
  %s7 = ssub.s32 1, %s5
  %s8 = scalar_select 0, %s7, %s5
  $region1: #{tpu_custom_call.1} parent=0
    #allocation3 [shape = 'u8[8192]{0}', space=vmem, size = 0x2000, scoped, tag = 'output window, operand 0']
    #allocation4 [shape = 's32[2]{0}', space=sflag, size = 0x8, scoped, tag = 'scoped memory for tpu_custom_call.1']
    %9 = vsyncpa [#allocation4], 0
    %s10 = scalar_lea.sflag [#allocation4], 1
    %11 = vsyncpa %s10, 0
    loop: start=0, step=1, limit=18
    $region2: #{tpu_custom_call.1} parent=1 // loop_pre_header
      _
    $region3: #{tpu_custom_call.1} parent=1 // loop_header
      %s13 = sphi 0, %s17
      %p14 = scmp.ge.s32.totalorder %s13, 18
      %s20 = sphi 0, %s32
      %s21 = sphi 0, %s28
      %s22 = sphi 0, %s20
      %s23 = sphi 0, %s21
      %s24 = sphi 0, %s22
      %s25 = sphi 0, %s23
      %s35 = sphi 0, %s37
      %s38 = sphi 0, %s35
      %s39 = sphi 0, %s38
      %s55 = sphi 0, %s39
      %s61 = sphi 0, %s63
      %s64 = sphi 0, %s61
      %s65 = sphi 0, %s64
      %s81 = sphi 0, %s65
      %s87 = sphi 0, %s89
      %s90 = sphi 0, %s87
      %s91 = sphi 0, %s90
      %s107 = sphi 0, %s91
      %s113 = sphi 0, %s115
      %s116 = sphi 0, %s113
      %s117 = sphi 0, %s116
      %s133 = sphi 0, %s117
      %s139 = sphi 0, %s141
      %s142 = sphi 0, %s139
      %s143 = sphi 0, %s142
      %s159 = sphi 0, %s143
    $region4: #{tpu_custom_call.1} parent=1 // loop_header_branch
      %16 = sbr.rel (%p14) target = $region8
    $region5: #{tpu_custom_call.1} parent=1 // loop_body
      %s18 = ssub.s32 %s13, 1
      %s19 = ssub.s32 %s13, 2
      %s26 = sadd.s32 1, %s21
      %p27 = scmp.ge.s32.totalorder %s26, 2
      %s28 = scalar_select %p27, 0, %s26
      %s29 = sadd.s32 1, %s20
      %s30 = scalar_select %p27, %s29, %s20
      %p31 = scmp.ge.s32.totalorder %s30, 8
      %s32 = scalar_select %p31, 0, %s30
      %s33 = ssub.s32 %s20, %s32
      %p34 = scmp.eq.s32.totalorder %s33, 0
      %s36 = sadd.s32 %s35, 1
      %s37 = scalar_select %p34, %s35, %s36
      %p40 = pneg %p34
      %p41 = scmp.eq.s32.totalorder %s13, 15
      %p42 = por %p40, %p41
      %p43 = scmp.ne.s32.totalorder %s35, %s38
      %p44 = scmp.eq.s32.totalorder %s13, 0
      %p45 = por %p43, %p44
      %p46 = scmp.ne.s32.totalorder %s35, %s38
      %p47 = scmp.eq.s32.totalorder %s18, 15
      %p48 = por %p46, %p47
      %p49 = scmp.ne.s32.totalorder %s38, %s39
      %p50 = scmp.eq.s32.totalorder %s18, 0
      %p51 = por %p49, %p50
      %p52 = scmp.ne.s32.totalorder %s38, %s39
      %p53 = scmp.eq.s32.totalorder %s19, 15
      %p54 = por %p52, %p53
      %p56 = scmp.ne.s32.totalorder %s39, %s55
      %p57 = scmp.eq.s32.totalorder %s19, 0
      %p58 = por %p56, %p57
      %s59 = ssub.s32 %s20, %s32
      %p60 = scmp.eq.s32.totalorder %s59, 0
      %s62 = sadd.s32 %s61, 1
      %s63 = scalar_select %p60, %s61, %s62
      %p66 = pneg %p60
      %p67 = scmp.eq.s32.totalorder %s13, 15
      %p68 = por %p66, %p67
      %p69 = scmp.ne.s32.totalorder %s61, %s64
      %p70 = scmp.eq.s32.totalorder %s13, 0
      %p71 = por %p69, %p70
      %p72 = scmp.ne.s32.totalorder %s61, %s64
      %p73 = scmp.eq.s32.totalorder %s18, 15
      %p74 = por %p72, %p73
      %p75 = scmp.ne.s32.totalorder %s64, %s65
      %p76 = scmp.eq.s32.totalorder %s18, 0
      %p77 = por %p75, %p76
      %p78 = scmp.ne.s32.totalorder %s64, %s65
      %p79 = scmp.eq.s32.totalorder %s19, 15
      %p80 = por %p78, %p79
      %p82 = scmp.ne.s32.totalorder %s65, %s81
      %p83 = scmp.eq.s32.totalorder %s19, 0
      %p84 = por %p82, %p83
      %s85 = ssub.s32 %s21, %s28
      %p86 = scmp.eq.s32.totalorder %s85, 0
      %s88 = sadd.s32 %s87, 1
      %s89 = scalar_select %p86, %s87, %s88
      %p92 = pneg %p86
      %p93 = scmp.eq.s32.totalorder %s13, 15
      %p94 = por %p92, %p93
      %p95 = scmp.ne.s32.totalorder %s87, %s90
      %p96 = scmp.eq.s32.totalorder %s13, 0
      %p97 = por %p95, %p96
      %p98 = scmp.ne.s32.totalorder %s87, %s90
      %p99 = scmp.eq.s32.totalorder %s18, 15
      %p100 = por %p98, %p99
      %p101 = scmp.ne.s32.totalorder %s90, %s91
      %p102 = scmp.eq.s32.totalorder %s18, 0
      %p103 = por %p101, %p102
      %p104 = scmp.ne.s32.totalorder %s90, %s91
      %p105 = scmp.eq.s32.totalorder %s19, 15
      %p106 = por %p104, %p105
      %p108 = scmp.ne.s32.totalorder %s91, %s107
      %p109 = scmp.eq.s32.totalorder %s19, 0
      %p110 = por %p108, %p109
      %s111 = ssub.s32 %s21, %s28
      %p112 = scmp.eq.s32.totalorder %s111, 0
      %s114 = sadd.s32 %s113, 1
      %s115 = scalar_select %p112, %s113, %s114
      %p118 = pneg %p112
      %p119 = scmp.eq.s32.totalorder %s13, 15
      %p120 = por %p118, %p119
      %p121 = scmp.ne.s32.totalorder %s113, %s116
      %p122 = scmp.eq.s32.totalorder %s13, 0
      %p123 = por %p121, %p122
      %p124 = scmp.ne.s32.totalorder %s113, %s116
      %p125 = scmp.eq.s32.totalorder %s18, 15
      %p126 = por %p124, %p125
      %p127 = scmp.ne.s32.totalorder %s116, %s117
      %p128 = scmp.eq.s32.totalorder %s18, 0
      %p129 = por %p127, %p128
      %p130 = scmp.ne.s32.totalorder %s116, %s117
      %p131 = scmp.eq.s32.totalorder %s19, 15
      %p132 = por %p130, %p131
      %p134 = scmp.ne.s32.totalorder %s117, %s133
      %p135 = scmp.eq.s32.totalorder %s19, 0
      %p136 = por %p134, %p135
      %s137 = ssub.s32 %s20, %s32
      %p138 = scmp.eq.s32.totalorder %s137, 0
      %s140 = sadd.s32 %s139, 1
      %s141 = scalar_select %p138, %s139, %s140
      %p144 = pneg %p138
      %p145 = scmp.eq.s32.totalorder %s13, 15
      %p146 = por %p144, %p145
      %p147 = scmp.ne.s32.totalorder %s139, %s142
      %p148 = scmp.eq.s32.totalorder %s13, 0
      %p149 = por %p147, %p148
      %p150 = scmp.ne.s32.totalorder %s139, %s142
      %p151 = scmp.eq.s32.totalorder %s18, 15
      %p152 = por %p150, %p151
      %p153 = scmp.ne.s32.totalorder %s142, %s143
      %p154 = scmp.eq.s32.totalorder %s18, 0
      %p155 = por %p153, %p154
      %p156 = scmp.ne.s32.totalorder %s142, %s143
      %p157 = scmp.eq.s32.totalorder %s19, 15
      %p158 = por %p156, %p157
      %p160 = scmp.ne.s32.totalorder %s143, %s159
      %p161 = scmp.eq.s32.totalorder %s19, 0
      %p162 = por %p160, %p161
      %p163 = scmp.le.s32.totalorder 1, %s13
      %p164 = scmp.lt.s32.totalorder %s13, 17
      %p165 = pnand %p163, %p164
      %p166 = pneg %p165
      // Predicated region
      $region9: #{tpu_custom_call.1} parent=5 // pred_check
        _
      $region10: #{tpu_custom_call.1} parent=5 // pred_check_branch
        %168 = sbr.rel (%p165) target = $region12
      $region11: #{tpu_custom_call.1} parent=5 // pred_region
        %s169 = ssub.s32 %s13, 1
      $region12: #{tpu_custom_call.1} parent=5 // pred_fallthru
        _
      %p170 = scmp.lt.s32.totalorder %s13, 16
      // Predicated region
      $region13: #{tpu_custom_call.1} parent=5 // pred_check
        %p171 = pneg %p170
      $region14: #{tpu_custom_call.1} parent=5 // pred_check_branch
        %173 = sbr.rel (%p171) target = $region16
      $region15: #{tpu_custom_call.1} parent=5 // pred_region
        // Predicated region
        $region17: #{tpu_custom_call.1} parent=15 // pred_check
          %p174 = pneg %p45
        $region18: #{tpu_custom_call.1} parent=15 // pred_check_branch
          %176 = sbr.rel (%p174) target = $region20
        $region19: #{tpu_custom_call.1} parent=15 // pred_region
          %s177 = smul.u32 16, %s20
          %p178 = scmp.lt.s32.totalorder %s177, 127
          %s179 = scalar_select %p178, %s177, 127
          %s180 = smul.addr %s179, 8
          %s181 = scalar_lea.vmem %s0, %s180
          %s182 = smul.u32 16, %s20
        $region20: #{tpu_custom_call.1} parent=15 // pred_fallthru
          _
        // Predicated region
        $region21: #{tpu_custom_call.1} parent=15 // pred_check
          %p183 = pneg %p71
        $region22: #{tpu_custom_call.1} parent=15 // pred_check_branch
          %185 = sbr.rel (%p183) target = $region24
        $region23: #{tpu_custom_call.1} parent=15 // pred_region
          %s186 = smul.u32 16, %s20
          %p187 = scmp.lt.s32.totalorder %s186, 127
          %s188 = scalar_select %p187, %s186, 127
          %s189 = smul.addr %s188, 8
          %s190 = scalar_lea.vmem %s1, %s189
          %s191 = smul.u32 16, %s20
        $region24: #{tpu_custom_call.1} parent=15 // pred_fallthru
          _
        // Predicated region
        $region25: #{tpu_custom_call.1} parent=15 // pred_check
          %p192 = pneg %p97
        $region26: #{tpu_custom_call.1} parent=15 // pred_check_branch
          %194 = sbr.rel (%p192) target = $region28
        $region27: #{tpu_custom_call.1} parent=15 // pred_region
          %s195 = smul.u32 4, %s21
          %p196 = scmp.lt.s32.totalorder %s195, 7
          %s197 = scalar_select %p196, %s195, 7
          %s198 = scalar_lea.vmem %s2, %s197
          %s199 = smul.u32 4, %s21
        $region28: #{tpu_custom_call.1} parent=15 // pred_fallthru
          _
        // Predicated region
        $region29: #{tpu_custom_call.1} parent=15 // pred_check
          %p200 = pneg %p123
        $region30: #{tpu_custom_call.1} parent=15 // pred_check_branch
          %202 = sbr.rel (%p200) target = $region32
        $region31: #{tpu_custom_call.1} parent=15 // pred_region
          %s203 = smul.u32 4, %s21
          %p204 = scmp.lt.s32.totalorder %s203, 7
          %s205 = scalar_select %p204, %s203, 7
          %s206 = scalar_lea.vmem %s3, %s205
          %s207 = smul.u32 4, %s21
        $region32: #{tpu_custom_call.1} parent=15 // pred_fallthru
          _
      $region16: #{tpu_custom_call.1} parent=5 // pred_fallthru
        _
      %p208 = scmp.le.s32.totalorder 1, %s13
      %p209 = scmp.lt.s32.totalorder %s13, 17
      %p210 = pnand %p208, %p209
      %p211 = pneg %p210
      // Predicated region
      $region33: #{tpu_custom_call.1} parent=5 // pred_check
        _
      $region34: #{tpu_custom_call.1} parent=5 // pred_check_branch
        %213 = sbr.rel (%p210) target = $region36
      $region35: #{tpu_custom_call.1} parent=5 // pred_region
        %s214 = ssub.s32 %s13, 1
        %s215 = smul.u32 16, %s22
        %p216 = scmp.lt.s32.totalorder %s215, 127
        %s217 = scalar_select %p216, %s215, 127
        %s218 = smul.addr %s217, 8
        %s219 = scalar_lea.vmem %s0, %s218
        %p220 = pneg %p51
        %p221 = pneg %p48
        %s222 = smul.u32 16, %s22
        %p223 = scmp.lt.s32.totalorder %s222, 127
        %s224 = scalar_select %p223, %s222, 127
        %s225 = smul.addr %s224, 8
        %s226 = scalar_lea.vmem %s1, %s225
        %p227 = pneg %p77
        %p228 = pneg %p74
        %s229 = smul.u32 4, %s23
        %p230 = scmp.lt.s32.totalorder %s229, 7
        %s231 = scalar_select %p230, %s229, 7
        %s232 = scalar_lea.vmem %s2, %s231
        %p233 = pneg %p103
        %p234 = pneg %p100
        %s235 = smul.u32 4, %s23
        %p236 = scmp.lt.s32.totalorder %s235, 7
        %s237 = scalar_select %p236, %s235, 7
        %s238 = scalar_lea.vmem %s3, %s237
        %p239 = pneg %p129
        %p240 = pneg %p126
        %p241 = pneg %p155
        %p242 = pneg %p152
        %s243 = sand.u32 %s142, 1
        %s244 = scalar_lea.sflag [#allocation4], %s243
        %s245 = sand.u32 %s142, 1
        %s246 = smul.addr %s245, 8
        %s247 = scalar_lea.vmem [#allocation3], %s246
        %s248 = smul.u32 16, %s22
        %p249 = scmp.lt.s32.totalorder %s248, 127
        %s250 = scalar_select %p249, %s248, 127
        %s251 = smul.addr %s250, 8
        %s252 = scalar_lea.vmem %s0, %s251
        %s253 = smul.u32 16, %s22
        %s254 = smul.u32 16, %s22
        %p255 = scmp.lt.s32.totalorder %s254, 127
        %s256 = scalar_select %p255, %s254, 127
        %s257 = smul.addr %s256, 8
        %s258 = scalar_lea.vmem %s1, %s257
        %s259 = smul.u32 16, %s22
        %s260 = smul.u32 4, %s23
        %p261 = scmp.lt.s32.totalorder %s260, 7
        %s262 = scalar_select %p261, %s260, 7
        %s263 = scalar_lea.vmem %s2, %s262
        %s264 = smul.u32 4, %s23
        %s265 = smul.u32 4, %s23
        %p266 = scmp.lt.s32.totalorder %s265, 7
        %s267 = scalar_select %p266, %s265, 7
        %s268 = scalar_lea.vmem %s3, %s267
        %s269 = smul.u32 4, %s23
        %p270 = scmp.eq.s32.totalorder %s23, 0
        // Predicated region
        $region37: #{tpu_custom_call.1} parent=35 // pred_check
          %p271 = pneg %p270
        $region38: #{tpu_custom_call.1} parent=35 // pred_check_branch
          %273 = sbr.rel (%p271) target = $region40
        $region39: #{tpu_custom_call.1} parent=35 // pred_region
          %274 = vst [vmem:[#allocation2] sm:$0xff] 0.0
          %275 = vst [vmem:[#allocation2 + $0x8] sm:$0xff] 0.0
          %276 = vst [vmem:[#allocation2 + $0x10] sm:$0xff] 0.0
          %277 = vst [vmem:[#allocation2 + $0x18] sm:$0xff] 0.0
          %278 = vst [vmem:[#allocation2 + $0x20] sm:$0xff] 0.0
          %279 = vst [vmem:[#allocation2 + $0x28] sm:$0xff] 0.0
          %280 = vst [vmem:[#allocation2 + $0x30] sm:$0xff] 0.0
          %281 = vst [vmem:[#allocation2 + $0x38] sm:$0xff] 0.0
          %282 = vst [vmem:[#allocation2 + $0x40] sm:$0xff] 0.0
          %283 = vst [vmem:[#allocation2 + $0x48] sm:$0xff] 0.0
          %284 = vst [vmem:[#allocation2 + $0x50] sm:$0xff] 0.0
          %285 = vst [vmem:[#allocation2 + $0x58] sm:$0xff] 0.0
          %286 = vst [vmem:[#allocation2 + $0x60] sm:$0xff] 0.0
          %287 = vst [vmem:[#allocation2 + $0x68] sm:$0xff] 0.0
          %288 = vst [vmem:[#allocation2 + $0x70] sm:$0xff] 0.0
          %289 = vst [vmem:[#allocation2 + $0x78] sm:$0xff] 0.0
        $region40: #{tpu_custom_call.1} parent=35 // pred_fallthru
          _
        %v290 = vld [vmem:[%s252] sm:$0xff]
        %v291 = vld [vmem:[%s252 + $0x8] sm:$0xff]
        %v292 = vld [vmem:[%s252 + $0x10] sm:$0xff]
        %v293 = vld [vmem:[%s252 + $0x18] sm:$0xff]
        %v294 = vld [vmem:[%s252 + $0x20] sm:$0xff]
        %v295 = vld [vmem:[%s252 + $0x28] sm:$0xff]
        %v296 = vld [vmem:[%s252 + $0x30] sm:$0xff]
        %v297 = vld [vmem:[%s252 + $0x38] sm:$0xff]
        %v298 = vld [vmem:[%s252 + $0x40] sm:$0xff]
        %v299 = vld [vmem:[%s252 + $0x48] sm:$0xff]
        %v300 = vld [vmem:[%s252 + $0x50] sm:$0xff]
        %v301 = vld [vmem:[%s252 + $0x58] sm:$0xff]
        %v302 = vld [vmem:[%s252 + $0x60] sm:$0xff]
        %v303 = vld [vmem:[%s252 + $0x68] sm:$0xff]
        %v304 = vld [vmem:[%s252 + $0x70] sm:$0xff]
        %v305 = vld [vmem:[%s252 + $0x78] sm:$0xff]
        loop: start=0, step=1, limit=2
        $region41: #{tpu_custom_call.1} parent=35 // loop_pre_header
          _
        $region42: #{tpu_custom_call.1} parent=35 // loop_header
          %s307 = sphi 0, %s311
          %p308 = scmp.ge.s32.totalorder %s307, 2
        $region43: #{tpu_custom_call.1} parent=35 // loop_header_branch
          %310 = sbr.rel (%p308) target = $region47
        $region44: #{tpu_custom_call.1} parent=35 // loop_body
          %s312 = smul.u32 %s307, 256
          %s313 = sshra.s32 %s312, 7
          %s314 = sand.u32 %s312, 127
          %s315 = scalar_lea.vmem %s263, %s313
          %v316 = vld [vmem:[%s315] sm:$0x1]
          %s317 = scalar_lea.vmem %s268, %s313
          %v318 = vld [vmem:[%s317] sm:$0x1]
          %v319 = vadd.f32 %v318, %v318
          %321 = vset.pattern.permute.xlu0 0
          %322 = vperm.xlu0 %321, %v290
          %v323 = vpop.permute.xlu0 %322
          %326 = vset.pattern.permute.xlu0 0
          %327 = vperm.xlu0 %326, %v291
          %v328 = vpop.permute.xlu0 %327
          %331 = vset.pattern.permute.xlu0 0
          %332 = vperm.xlu0 %331, %v292
          %v333 = vpop.permute.xlu0 %332
          %336 = vset.pattern.permute.xlu0 0
          %337 = vperm.xlu0 %336, %v293
          %v338 = vpop.permute.xlu0 %337
          %341 = vset.pattern.permute.xlu0 0
          %342 = vperm.xlu0 %341, %v294
          %v343 = vpop.permute.xlu0 %342
          %346 = vset.pattern.permute.xlu0 0
          %347 = vperm.xlu0 %346, %v295
          %v348 = vpop.permute.xlu0 %347
          %351 = vset.pattern.permute.xlu0 0
          %352 = vperm.xlu0 %351, %v296
          %v353 = vpop.permute.xlu0 %352
          %356 = vset.pattern.permute.xlu0 0
          %357 = vperm.xlu0 %356, %v297
          %v358 = vpop.permute.xlu0 %357
          %361 = vset.pattern.permute.xlu0 0
          %362 = vperm.xlu0 %361, %v298
          %v363 = vpop.permute.xlu0 %362
          %366 = vset.pattern.permute.xlu0 0
          %367 = vperm.xlu0 %366, %v299
          %v368 = vpop.permute.xlu0 %367
          %371 = vset.pattern.permute.xlu0 0
          %372 = vperm.xlu0 %371, %v300
          %v373 = vpop.permute.xlu0 %372
          %376 = vset.pattern.permute.xlu0 0
          %377 = vperm.xlu0 %376, %v301
          %v378 = vpop.permute.xlu0 %377
          %381 = vset.pattern.permute.xlu0 0
          %382 = vperm.xlu0 %381, %v302
          %v383 = vpop.permute.xlu0 %382
          %386 = vset.pattern.permute.xlu0 0
          %387 = vperm.xlu0 %386, %v303
          %v388 = vpop.permute.xlu0 %387
          %391 = vset.pattern.permute.xlu0 0
          %392 = vperm.xlu0 %391, %v304
          %v393 = vpop.permute.xlu0 %392
          %396 = vset.pattern.permute.xlu0 0
          %397 = vperm.xlu0 %396, %v305
          %v398 = vpop.permute.xlu0 %397
          %v401 = vlaneseq
          %v402 = vshrl.u32 %v401, 7
          %v403 = vsub.s32 0, %v402
          %v404 = vrot.slane %v316, %v403
          %vm406 = vcmp.gt.f32.partialorder %v323, %v404
          %vm407 = vcmp.gt.f32.partialorder %v328, %v404
          %vm408 = vcmp.gt.f32.partialorder %v333, %v404
          %vm409 = vcmp.gt.f32.partialorder %v338, %v404
          %vm410 = vcmp.gt.f32.partialorder %v343, %v404
          %vm411 = vcmp.gt.f32.partialorder %v348, %v404
          %vm412 = vcmp.gt.f32.partialorder %v353, %v404
          %vm413 = vcmp.gt.f32.partialorder %v358, %v404
          %vm414 = vcmp.gt.f32.partialorder %v363, %v404
          %vm415 = vcmp.gt.f32.partialorder %v368, %v404
          %vm416 = vcmp.gt.f32.partialorder %v373, %v404
          %vm417 = vcmp.gt.f32.partialorder %v378, %v404
          %vm418 = vcmp.gt.f32.partialorder %v383, %v404
          %vm419 = vcmp.gt.f32.partialorder %v388, %v404
          %vm420 = vcmp.gt.f32.partialorder %v393, %v404
          %vm421 = vcmp.gt.f32.partialorder %v398, %v404
          %vm422 = vcmp.eq.f32.partialorder %v323, %v404
          %vm423 = vcmp.eq.f32.partialorder %v328, %v404
          %vm424 = vcmp.eq.f32.partialorder %v333, %v404
          %vm425 = vcmp.eq.f32.partialorder %v338, %v404
          %vm426 = vcmp.eq.f32.partialorder %v343, %v404
          %vm427 = vcmp.eq.f32.partialorder %v348, %v404
          %vm428 = vcmp.eq.f32.partialorder %v353, %v404
          %vm429 = vcmp.eq.f32.partialorder %v358, %v404
          %vm430 = vcmp.eq.f32.partialorder %v363, %v404
          %vm431 = vcmp.eq.f32.partialorder %v368, %v404
          %vm432 = vcmp.eq.f32.partialorder %v373, %v404
          %vm433 = vcmp.eq.f32.partialorder %v378, %v404
          %vm434 = vcmp.eq.f32.partialorder %v383, %v404
          %vm435 = vcmp.eq.f32.partialorder %v388, %v404
          %vm436 = vcmp.eq.f32.partialorder %v393, %v404
          %vm437 = vcmp.eq.f32.partialorder %v398, %v404
          %v439 = vlaneseq
          %v440 = vshrl.u32 %v439, 7
          %v441 = vsub.s32 0, %v440
          %v442 = vrot.slane %v318, %v441
          %v444 = vsel %vm422, %v442, 0.0
          %v445 = vsel %vm423, %v442, 0.0
          %v446 = vsel %vm424, %v442, 0.0
          %v447 = vsel %vm425, %v442, 0.0
          %v448 = vsel %vm426, %v442, 0.0
          %v449 = vsel %vm427, %v442, 0.0
          %v450 = vsel %vm428, %v442, 0.0
          %v451 = vsel %vm429, %v442, 0.0
          %v452 = vsel %vm430, %v442, 0.0
          %v453 = vsel %vm431, %v442, 0.0
          %v454 = vsel %vm432, %v442, 0.0
          %v455 = vsel %vm433, %v442, 0.0
          %v456 = vsel %vm434, %v442, 0.0
          %v457 = vsel %vm435, %v442, 0.0
          %v458 = vsel %vm436, %v442, 0.0
          %v459 = vsel %vm437, %v442, 0.0
          %v461 = vlaneseq
          %v462 = vshrl.u32 %v461, 7
          %v463 = vsub.s32 0, %v462
          %v464 = vrot.slane %v319, %v463
          %v466 = vsel %vm406, %v464, %v444
          %v467 = vsel %vm407, %v464, %v445
          %v468 = vsel %vm408, %v464, %v446
          %v469 = vsel %vm409, %v464, %v447
          %v470 = vsel %vm410, %v464, %v448
          %v471 = vsel %vm411, %v464, %v449
          %v472 = vsel %vm412, %v464, %v450
          %v473 = vsel %vm413, %v464, %v451
          %v474 = vsel %vm414, %v464, %v452
          %v475 = vsel %vm415, %v464, %v453
          %v476 = vsel %vm416, %v464, %v454
          %v477 = vsel %vm417, %v464, %v455
          %v478 = vsel %vm418, %v464, %v456
          %v479 = vsel %vm419, %v464, %v457
          %v480 = vsel %vm420, %v464, %v458
          %v481 = vsel %vm421, %v464, %v459
          %s482 = sadd.s32 %s312, 128
          %s483 = sshra.s32 %s482, 7
          %s484 = sand.u32 %s482, 127
          %s485 = scalar_lea.vmem %s263, %s483
          %v486 = vld [vmem:[%s485] sm:$0x1]
          %s487 = scalar_lea.vmem %s268, %s483
          %v488 = vld [vmem:[%s487] sm:$0x1]
          %v489 = vadd.f32 %v488, %v488
          %v491 = vlaneseq
          %v492 = vshrl.u32 %v491, 7
          %v493 = vsub.s32 0, %v492
          %v494 = vrot.slane %v486, %v493
          %vm496 = vcmp.gt.f32.partialorder %v323, %v494
          %vm497 = vcmp.gt.f32.partialorder %v328, %v494
          %vm498 = vcmp.gt.f32.partialorder %v333, %v494
          %vm499 = vcmp.gt.f32.partialorder %v338, %v494
          %vm500 = vcmp.gt.f32.partialorder %v343, %v494
          %vm501 = vcmp.gt.f32.partialorder %v348, %v494
          %vm502 = vcmp.gt.f32.partialorder %v353, %v494
          %vm503 = vcmp.gt.f32.partialorder %v358, %v494
          %vm504 = vcmp.gt.f32.partialorder %v363, %v494
          %vm505 = vcmp.gt.f32.partialorder %v368, %v494
          %vm506 = vcmp.gt.f32.partialorder %v373, %v494
          %vm507 = vcmp.gt.f32.partialorder %v378, %v494
          %vm508 = vcmp.gt.f32.partialorder %v383, %v494
          %vm509 = vcmp.gt.f32.partialorder %v388, %v494
          %vm510 = vcmp.gt.f32.partialorder %v393, %v494
          %vm511 = vcmp.gt.f32.partialorder %v398, %v494
          %vm512 = vcmp.eq.f32.partialorder %v323, %v494
          %vm513 = vcmp.eq.f32.partialorder %v328, %v494
          %vm514 = vcmp.eq.f32.partialorder %v333, %v494
          %vm515 = vcmp.eq.f32.partialorder %v338, %v494
          %vm516 = vcmp.eq.f32.partialorder %v343, %v494
          %vm517 = vcmp.eq.f32.partialorder %v348, %v494
          %vm518 = vcmp.eq.f32.partialorder %v353, %v494
          %vm519 = vcmp.eq.f32.partialorder %v358, %v494
          %vm520 = vcmp.eq.f32.partialorder %v363, %v494
          %vm521 = vcmp.eq.f32.partialorder %v368, %v494
          %vm522 = vcmp.eq.f32.partialorder %v373, %v494
          %vm523 = vcmp.eq.f32.partialorder %v378, %v494
          %vm524 = vcmp.eq.f32.partialorder %v383, %v494
          %vm525 = vcmp.eq.f32.partialorder %v388, %v494
          %vm526 = vcmp.eq.f32.partialorder %v393, %v494
          %vm527 = vcmp.eq.f32.partialorder %v398, %v494
          %v529 = vlaneseq
          %v530 = vshrl.u32 %v529, 7
          %v531 = vsub.s32 0, %v530
          %v532 = vrot.slane %v488, %v531
          %v534 = vsel %vm512, %v532, 0.0
          %v535 = vsel %vm513, %v532, 0.0
          %v536 = vsel %vm514, %v532, 0.0
          %v537 = vsel %vm515, %v532, 0.0
          %v538 = vsel %vm516, %v532, 0.0
          %v539 = vsel %vm517, %v532, 0.0
          %v540 = vsel %vm518, %v532, 0.0
          %v541 = vsel %vm519, %v532, 0.0
          %v542 = vsel %vm520, %v532, 0.0
          %v543 = vsel %vm521, %v532, 0.0
          %v544 = vsel %vm522, %v532, 0.0
          %v545 = vsel %vm523, %v532, 0.0
          %v546 = vsel %vm524, %v532, 0.0
          %v547 = vsel %vm525, %v532, 0.0
          %v548 = vsel %vm526, %v532, 0.0
          %v549 = vsel %vm527, %v532, 0.0
          %v551 = vlaneseq
          %v552 = vshrl.u32 %v551, 7
          %v553 = vsub.s32 0, %v552
          %v554 = vrot.slane %v489, %v553
          %v556 = vsel %vm496, %v554, %v534
          %v557 = vsel %vm497, %v554, %v535
          %v558 = vsel %vm498, %v554, %v536
          %v559 = vsel %vm499, %v554, %v537
          %v560 = vsel %vm500, %v554, %v538
          %v561 = vsel %vm501, %v554, %v539
          %v562 = vsel %vm502, %v554, %v540
          %v563 = vsel %vm503, %v554, %v541
          %v564 = vsel %vm504, %v554, %v542
          %v565 = vsel %vm505, %v554, %v543
          %v566 = vsel %vm506, %v554, %v544
          %v567 = vsel %vm507, %v554, %v545
          %v568 = vsel %vm508, %v554, %v546
          %v569 = vsel %vm509, %v554, %v547
          %v570 = vsel %vm510, %v554, %v548
          %v571 = vsel %vm511, %v554, %v549
          %v572 = vadd.f32 %v466, %v556
          %v573 = vadd.f32 %v467, %v557
          %v574 = vadd.f32 %v468, %v558
          %v575 = vadd.f32 %v469, %v559
          %v576 = vadd.f32 %v470, %v560
          %v577 = vadd.f32 %v471, %v561
          %v578 = vadd.f32 %v472, %v562
          %v579 = vadd.f32 %v473, %v563
          %v580 = vadd.f32 %v474, %v564
          %v581 = vadd.f32 %v475, %v565
          %v582 = vadd.f32 %v476, %v566
          %v583 = vadd.f32 %v477, %v567
          %v584 = vadd.f32 %v478, %v568
          %v585 = vadd.f32 %v479, %v569
          %v586 = vadd.f32 %v480, %v570
          %v587 = vadd.f32 %v481, %v571
          %v588 = vld [vmem:[#allocation2] sm:$0xff]
          %v589 = vld [vmem:[#allocation2 + $0x8] sm:$0xff]
          %v590 = vld [vmem:[#allocation2 + $0x10] sm:$0xff]
          %v591 = vld [vmem:[#allocation2 + $0x18] sm:$0xff]
          %v592 = vld [vmem:[#allocation2 + $0x20] sm:$0xff]
          %v593 = vld [vmem:[#allocation2 + $0x28] sm:$0xff]
          %v594 = vld [vmem:[#allocation2 + $0x30] sm:$0xff]
          %v595 = vld [vmem:[#allocation2 + $0x38] sm:$0xff]
          %v596 = vld [vmem:[#allocation2 + $0x40] sm:$0xff]
          %v597 = vld [vmem:[#allocation2 + $0x48] sm:$0xff]
          %v598 = vld [vmem:[#allocation2 + $0x50] sm:$0xff]
          %v599 = vld [vmem:[#allocation2 + $0x58] sm:$0xff]
          %v600 = vld [vmem:[#allocation2 + $0x60] sm:$0xff]
          %v601 = vld [vmem:[#allocation2 + $0x68] sm:$0xff]
          %v602 = vld [vmem:[#allocation2 + $0x70] sm:$0xff]
          %v603 = vld [vmem:[#allocation2 + $0x78] sm:$0xff]
          %v604 = vadd.f32 %v588, %v572
          %v605 = vadd.f32 %v589, %v573
          %v606 = vadd.f32 %v590, %v574
          %v607 = vadd.f32 %v591, %v575
          %v608 = vadd.f32 %v592, %v576
          %v609 = vadd.f32 %v593, %v577
          %v610 = vadd.f32 %v594, %v578
          %v611 = vadd.f32 %v595, %v579
          %v612 = vadd.f32 %v596, %v580
          %v613 = vadd.f32 %v597, %v581
          %v614 = vadd.f32 %v598, %v582
          %v615 = vadd.f32 %v599, %v583
          %v616 = vadd.f32 %v600, %v584
          %v617 = vadd.f32 %v601, %v585
          %v618 = vadd.f32 %v602, %v586
          %v619 = vadd.f32 %v603, %v587
          %620 = vst [vmem:[#allocation2] sm:$0xff] %v604
          %621 = vst [vmem:[#allocation2 + $0x8] sm:$0xff] %v605
          %622 = vst [vmem:[#allocation2 + $0x10] sm:$0xff] %v606
          %623 = vst [vmem:[#allocation2 + $0x18] sm:$0xff] %v607
          %624 = vst [vmem:[#allocation2 + $0x20] sm:$0xff] %v608
          %625 = vst [vmem:[#allocation2 + $0x28] sm:$0xff] %v609
          %626 = vst [vmem:[#allocation2 + $0x30] sm:$0xff] %v610
          %627 = vst [vmem:[#allocation2 + $0x38] sm:$0xff] %v611
          %628 = vst [vmem:[#allocation2 + $0x40] sm:$0xff] %v612
          %629 = vst [vmem:[#allocation2 + $0x48] sm:$0xff] %v613
          %630 = vst [vmem:[#allocation2 + $0x50] sm:$0xff] %v614
          %631 = vst [vmem:[#allocation2 + $0x58] sm:$0xff] %v615
          %632 = vst [vmem:[#allocation2 + $0x60] sm:$0xff] %v616
          %633 = vst [vmem:[#allocation2 + $0x68] sm:$0xff] %v617
          %634 = vst [vmem:[#allocation2 + $0x70] sm:$0xff] %v618
          %635 = vst [vmem:[#allocation2 + $0x78] sm:$0xff] %v619
        $region45: #{tpu_custom_call.1} parent=35 // loop_footer
          %s311 = sadd.s32 1, %s307
        $region46: #{tpu_custom_call.1} parent=35 // loop_footer_branch
          %306 = sbr.rel target = $region42
        $region47: #{tpu_custom_call.1} parent=35 // loop_exit
          _
        %p636 = scmp.eq.s32.totalorder %s23, 1
        // Predicated region
        $region48: #{tpu_custom_call.1} parent=35 // pred_check
          %p637 = pneg %p636
        $region49: #{tpu_custom_call.1} parent=35 // pred_check_branch
          %639 = sbr.rel (%p637) target = $region51
        $region50: #{tpu_custom_call.1} parent=35 // pred_region
          %v640 = vld [vmem:[#allocation2] sm:$0xff]
          %v641 = vld [vmem:[#allocation2 + $0x8] sm:$0xff]
          %v642 = vld [vmem:[#allocation2 + $0x10] sm:$0xff]
          %v643 = vld [vmem:[#allocation2 + $0x18] sm:$0xff]
          %v644 = vld [vmem:[#allocation2 + $0x20] sm:$0xff]
          %v645 = vld [vmem:[#allocation2 + $0x28] sm:$0xff]
          %v646 = vld [vmem:[#allocation2 + $0x30] sm:$0xff]
          %v647 = vld [vmem:[#allocation2 + $0x38] sm:$0xff]
          %v648 = vld [vmem:[#allocation2 + $0x40] sm:$0xff]
          %v649 = vld [vmem:[#allocation2 + $0x48] sm:$0xff]
          %v650 = vld [vmem:[#allocation2 + $0x50] sm:$0xff]
          %v651 = vld [vmem:[#allocation2 + $0x58] sm:$0xff]
          %v652 = vld [vmem:[#allocation2 + $0x60] sm:$0xff]
          %v653 = vld [vmem:[#allocation2 + $0x68] sm:$0xff]
          %v654 = vld [vmem:[#allocation2 + $0x70] sm:$0xff]
          %v655 = vld [vmem:[#allocation2 + $0x78] sm:$0xff]
          %656 = vadd.xlane.f32.xlu0 %v640
          %v657 = vpop.xlane.xlu0 %656
          %658 = vadd.xlane.f32.xlu0 %v641
          %v659 = vpop.xlane.xlu0 %658
          %660 = vadd.xlane.f32.xlu0 %v642
          %v661 = vpop.xlane.xlu0 %660
          %662 = vadd.xlane.f32.xlu0 %v643
          %v663 = vpop.xlane.xlu0 %662
          %664 = vadd.xlane.f32.xlu0 %v644
          %v665 = vpop.xlane.xlu0 %664
          %666 = vadd.xlane.f32.xlu0 %v645
          %v667 = vpop.xlane.xlu0 %666
          %668 = vadd.xlane.f32.xlu0 %v646
          %v669 = vpop.xlane.xlu0 %668
          %670 = vadd.xlane.f32.xlu0 %v647
          %v671 = vpop.xlane.xlu0 %670
          %672 = vadd.xlane.f32.xlu0 %v648
          %v673 = vpop.xlane.xlu0 %672
          %674 = vadd.xlane.f32.xlu0 %v649
          %v675 = vpop.xlane.xlu0 %674
          %676 = vadd.xlane.f32.xlu0 %v650
          %v677 = vpop.xlane.xlu0 %676
          %678 = vadd.xlane.f32.xlu0 %v651
          %v679 = vpop.xlane.xlu0 %678
          %680 = vadd.xlane.f32.xlu0 %v652
          %v681 = vpop.xlane.xlu0 %680
          %682 = vadd.xlane.f32.xlu0 %v653
          %v683 = vpop.xlane.xlu0 %682
          %684 = vadd.xlane.f32.xlu0 %v654
          %v685 = vpop.xlane.xlu0 %684
          %686 = vadd.xlane.f32.xlu0 %v655
          %v687 = vpop.xlane.xlu0 %686
          %v688 = vld [vmem:[%s258] sm:$0xff]
          %v689 = vld [vmem:[%s258 + $0x8] sm:$0xff]
          %v690 = vld [vmem:[%s258 + $0x10] sm:$0xff]
          %v691 = vld [vmem:[%s258 + $0x18] sm:$0xff]
          %v692 = vld [vmem:[%s258 + $0x20] sm:$0xff]
          %v693 = vld [vmem:[%s258 + $0x28] sm:$0xff]
          %v694 = vld [vmem:[%s258 + $0x30] sm:$0xff]
          %v695 = vld [vmem:[%s258 + $0x38] sm:$0xff]
          %v696 = vld [vmem:[%s258 + $0x40] sm:$0xff]
          %v697 = vld [vmem:[%s258 + $0x48] sm:$0xff]
          %v698 = vld [vmem:[%s258 + $0x50] sm:$0xff]
          %v699 = vld [vmem:[%s258 + $0x58] sm:$0xff]
          %v700 = vld [vmem:[%s258 + $0x60] sm:$0xff]
          %v701 = vld [vmem:[%s258 + $0x68] sm:$0xff]
          %v702 = vld [vmem:[%s258 + $0x70] sm:$0xff]
          %v703 = vld [vmem:[%s258 + $0x78] sm:$0xff]
          %v704 = vmul.f32 %v657, %v688
          %v705 = vmul.f32 %v659, %v689
          %v706 = vmul.f32 %v661, %v690
          %v707 = vmul.f32 %v663, %v691
          %v708 = vmul.f32 %v665, %v692
          %v709 = vmul.f32 %v667, %v693
          %v710 = vmul.f32 %v669, %v694
          %v711 = vmul.f32 %v671, %v695
          %v712 = vmul.f32 %v673, %v696
          %v713 = vmul.f32 %v675, %v697
          %v714 = vmul.f32 %v677, %v698
          %v715 = vmul.f32 %v679, %v699
          %v716 = vmul.f32 %v681, %v700
          %v717 = vmul.f32 %v683, %v701
          %v718 = vmul.f32 %v685, %v702
          %v719 = vmul.f32 %v687, %v703
          %vm720 = vcmask 7168
          %v721 = vsel %vm720, %v704, 0.0
          %v722 = vsel %vm720, %v705, 0.0
          %v723 = vadd.f32 %v721, %v722
          %v724 = vsel %vm720, %v706, 0.0
          %v725 = vadd.f32 %v723, %v724
          %v726 = vsel %vm720, %v707, 0.0
          %v727 = vadd.f32 %v725, %v726
          %v728 = vsel %vm720, %v708, 0.0
          %v729 = vadd.f32 %v727, %v728
          %v730 = vsel %vm720, %v709, 0.0
          %v731 = vadd.f32 %v729, %v730
          %v732 = vsel %vm720, %v710, 0.0
          %v733 = vadd.f32 %v731, %v732
          %v734 = vsel %vm720, %v711, 0.0
          %v735 = vadd.f32 %v733, %v734
          %v736 = vsel %vm720, %v712, 0.0
          %v737 = vadd.f32 %v735, %v736
          %v738 = vsel %vm720, %v713, 0.0
          %v739 = vadd.f32 %v737, %v738
          %v740 = vsel %vm720, %v714, 0.0
          %v741 = vadd.f32 %v739, %v740
          %v742 = vsel %vm720, %v715, 0.0
          %v743 = vadd.f32 %v741, %v742
          %v744 = vsel %vm720, %v716, 0.0
          %v745 = vadd.f32 %v743, %v744
          %v746 = vsel %vm720, %v717, 0.0
          %v747 = vadd.f32 %v745, %v746
          %v748 = vsel %vm720, %v718, 0.0
          %v749 = vadd.f32 %v747, %v748
          %v750 = vsel %vm720, %v719, 0.0
          %v751 = vadd.f32 %v749, %v750
          %752 = vadd.xlane.f32.xlu0 %v751
          %v753 = vpop.xlane.xlu0 %752
          %v754 = vrot.slane %v753, 4
          %v755 = vadd.f32 %v753, %v754
          %v756 = vrot.slane %v755, 2
          %v757 = vadd.f32 %v755, %v756
          %v758 = vrot.slane %v757, 1
          %v759 = vadd.f32 %v757, %v758
          %s760 = vtos %v759
          %v761 = vstv %s760
          %762 = vst [vmem:[%s247] sm:$0xff] %v761
        $region51: #{tpu_custom_call.1} parent=35 // pred_fallthru
          _
        %s763 = sand.u32 %s142, 1
        %s764 = scalar_lea.sflag [#allocation4], %s763
        %s765 = sand.u32 %s142, 1
        %s766 = smul.addr %s765, 8
        %s767 = scalar_lea.vmem [#allocation3], %s766
        // Predicated region
        $region52: #{tpu_custom_call.1} parent=35 // pred_check
          %p768 = pneg %p152
        $region53: #{tpu_custom_call.1} parent=35 // pred_check_branch
          %770 = sbr.rel (%p768) target = $region55
        $region54: #{tpu_custom_call.1} parent=35 // pred_region
          %s772 = ssub.s32 128, 128
          %773 = vsyncadd %s764, %s772
          %s774 = smul.addr %s22, 128
          %s775 = scalar_lea.hbm %s4, %s774
          %s777 = sshll.u32 %s767, 4
          %s778 = int_to_ptr.vmem [resolvable:$true] %s777
          %780 = dma.vmem_to_hbm [thread:$0]  %s778, 128, %s775, %s764
        $region55: #{tpu_custom_call.1} parent=35 // pred_fallthru
          _
      $region36: #{tpu_custom_call.1} parent=5 // pred_fallthru
        _
      %p781 = scmp.le.s32.totalorder 2, %s13
      // Predicated region
      $region56: #{tpu_custom_call.1} parent=5 // pred_check
        %p782 = pneg %p781
      $region57: #{tpu_custom_call.1} parent=5 // pred_check_branch
        %784 = sbr.rel (%p782) target = $region59
      $region58: #{tpu_custom_call.1} parent=5 // pred_region
        %s785 = ssub.s32 %s13, 2
        // Predicated region
        $region60: #{tpu_custom_call.1} parent=58 // pred_check
          %p786 = pneg %p158
        $region61: #{tpu_custom_call.1} parent=58 // pred_check_branch
          %788 = sbr.rel (%p786) target = $region63
        $region62: #{tpu_custom_call.1} parent=58 // pred_region
          %s789 = sand.u32 %s143, 1
          %s790 = scalar_lea.sflag [#allocation4], %s789
          %s791 = sand.u32 %s143, 1
          %s792 = smul.addr %s791, 8
          %s793 = scalar_lea.vmem [#allocation3], %s792
          %794 = dma.done %s790, 128
        $region63: #{tpu_custom_call.1} parent=58 // pred_fallthru
          _
      $region59: #{tpu_custom_call.1} parent=5 // pred_fallthru
        _
    $region6: #{tpu_custom_call.1} parent=1 // loop_footer
      %s17 = sadd.s32 1, %s13
    $region7: #{tpu_custom_call.1} parent=1 // loop_footer_branch
      %12 = sbr.rel target = $region3
    $region8: #{tpu_custom_call.1} parent=1 // loop_exit
      _
    %795 = vsyncpa [#allocation4], 1
    %s796 = scalar_lea.sflag [#allocation4], 1
    %797 = vsyncpa %s796, 1

</llo_original>
